<compile_context>
chip_gen: v7x
topology: tpu7x:2x2x1
jax: 0.10.0
libtpu: 0.0.40
codegen_flags: <defaults>
</compile_context>

<pallas_src>
import numpy as np
import jax
import jax.numpy as jnp
from jax import lax
from jax.experimental import pallas as pl
from jax.experimental.pallas import tpu as pltpu

MARGIN = 1.0
NUM_HARD_NEG = 3
NUM_RAND_NEG = 2
GAMMA = 4          # focal loss gamma (integer power -> cheap multiplies)
ALPHA = 0.75
EPS_NORM = 1e-12   # F.normalize eps
EPS_COS = 1e-8     # F.cosine_similarity eps
NEG_PAD = -1e30    # focal pad value: contributes exactly 0 to the t=0 focal sum in f32

USE_BF16_SIM = False        # optional: feed MXU bf16 operands (f32 accumulate) on v5e/v6e/v7x

SIM_COL_TILE = 512          # lane tile over the flattened N*k axis (multiple of 128)
FOCAL_LANES = 512           # lane-dense re-layout of graph_probs
FOCAL_MAX_BLOCK_ROWS = 512  # 512x512 f32 = 1 MiB block; fine on every generation incl. v7x


# ----------------------------- Pallas kernels -----------------------------

def _sim_kernel(ph_ref, x_ref, out_ref):
    # ph_ref: (m, d) pre-normalized phrases (resident, constant block index)
    # x_ref : (TC, d) tile of flattened input rows;  out_ref: (m, TC) lane-dense slab
    ph = ph_ref[...]
    x = x_ref[...]
    inv = lax.rsqrt(jnp.maximum(jnp.sum(x * x, axis=-1, keepdims=True),
                                EPS_NORM * EPS_NORM))          # == 1/max(||x||, eps)
    x_n = x * inv
    if USE_BF16_SIM:
        ph = ph.astype(jnp.bfloat16)
        x_n = x_n.astype(jnp.bfloat16)
    # contract on d directly (no explicit transpose materialized)
    out_ref[...] = lax.dot_general(ph, x_n, (((1,), (1,)), ((), ())),
                                   preferred_element_type=jnp.float32)


def similarity_matrix(phrase_embeddings, input_embeddings):
    """Cosine similarities in (m, N, k) layout: sim[p, n, i] = <phrase_p^, input_{n,i}^>."""
    N, k, d = input_embeddings.shape
    m = phrase_embeddings.shape[0]
    cols = N * k
    # hoist phrase normalization out of the gridded kernel (done once)
    ph_n = phrase_embeddings / jnp.maximum(
        jnp.sqrt(jnp.sum(phrase_embeddings * phrase_embeddings, axis=-1, keepdims=True)),
        EPS_NORM)
    x = input_embeddings.reshape(cols, d)
    tile = SIM_COL_TILE if cols >= SIM_COL_TILE else pl.cdiv(cols, 128) * 128
    cols_pad = pl.cdiv(cols, tile) * tile
    if cols_pad != cols:
        x = jnp.pad(x, ((0, cols_pad - cols), (0, 0)))   # zero rows -> zero sims, sliced off

    sim_flat = pl.pallas_call(
        _sim_kernel,
        out_shape=jax.ShapeDtypeStruct((m, cols_pad), jnp.float32),
        grid=(cols_pad // tile,),
        in_specs=[
            pl.BlockSpec((m, d), lambda c: (0, 0)),
            pl.BlockSpec((tile, d), lambda c: (c, 0)),
        ],
        out_specs=pl.BlockSpec((m, tile), lambda c: (0, c)),
        compiler_params=pltpu.CompilerParams(dimension_semantics=("parallel",)),
    )(ph_n, x)
    return sim_flat[:, :cols].reshape(m, N, k)


def _int_pow(x, n):
    acc = x
    for _ in range(n - 1):
        acc = acc * x
    return acc


def _focal_base_kernel(x_ref, out_ref, acc_ref):
    # x_ref: (BR, FOCAL_LANES) tile of flattened graph logits
    # out_ref: (1, 1) SMEM, acc_ref: (1,) SMEM accumulator persisting across grid steps
    g = pl.program_id(0)

    @pl.when(g == 0)
    def _():
        acc_ref[0] = 0.0

    x = x_ref[...]
    e = jnp.exp(-jnp.abs(x))                            # single transcendental per element
    inv1pe = pl.reciprocal(1.0 + e, approx=True)        # EUP vrcp
    p = jnp.where(x >= 0.0, 1.0, e) * inv1pe            # sigmoid(x), branch-stable
    ce0 = jnp.maximum(x, 0.0) + jnp.log(1.0 + e)        # BCE-with-logits at target 0
    acc_ref[0] += (1.0 - ALPHA) * jnp.sum(ce0 * _int_pow(p, GAMMA))

    @pl.when(g == pl.num_programs(0) - 1)
    def _():
        out_ref[0, 0] = acc_ref[0]


def focal_base_sum(graph_probs):
    """Sum over ALL elements of sigmoid_focal_loss(x, target=0). No dense targets in HBM."""
    flat = graph_probs.reshape(-1).astype(jnp.float32)
    E = flat.shape[0]
    R = pl.cdiv(E, FOCAL_LANES)
    BR = FOCAL_MAX_BLOCK_ROWS if R >= FOCAL_MAX_BLOCK_ROWS else R
    R_pad = pl.cdiv(R, BR) * BR
    total = R_pad * FOCAL_LANES
    if total != E:
        flat = jnp.pad(flat, (0, total - E), constant_values=NEG_PAD)  # exact-zero contribution
    x2d = flat.reshape(R_pad, FOCAL_LANES)

    out = pl.pallas_call(
        _focal_base_kernel,
        out_shape=jax.ShapeDtypeStruct((1, 1), jnp.float32),
        grid=(R_pad // BR,),
        in_specs=[pl.BlockSpec((BR, FOCAL_LANES), lambda g: (g, 0))],
        out_specs=pl.BlockSpec((1, 1), lambda g: (0, 0),
                               memory_space=pltpu.MemorySpace.SMEM),
        scratch_shapes=[pltpu.SMEM((1,), jnp.float32)],
        compiler_params=pltpu.CompilerParams(dimension_semantics=("arbitrary",)),
    )(x2d)
    return out[0, 0]


def _ce_kernel(z_ref, oh_ref, temp_ref, mv_ref, out_ref):
    # z/oh: (P, ML) VMEM (lane-padded), temp/mv: (1,) SMEM scalars, out: (1,1) SMEM
    temp = temp_ref[0]
    mv = mv_ref[0]
    z = z_ref[...] * temp
    col = lax.broadcasted_iota(jnp.int32, z.shape, 1)
    z = jnp.where(col < mv, z, -1e30)                   # finite mask -> no 0*inf NaN
    zmax = jnp.max(z, axis=-1, keepdims=True)
    lse = jnp.log(jnp.sum(jnp.exp(z - zmax), axis=-1, keepdims=True)) + zmax
    nll = jnp.sum(oh_ref[...] * (lse - z), axis=-1, keepdims=True)   # (P, 1)
    out_ref[0, 0] = jnp.sum(nll) * (1.0 / z.shape[0])


def ce_loss(logits, onehot, temperature):
    P, m = logits.shape
    ML = pl.cdiv(m, 128) * 128                          # lane-dense padding
    if ML != m:
        logits = jnp.pad(logits, ((0, 0), (0, ML - m)))
        onehot = jnp.pad(onehot, ((0, 0), (0, ML - m)))
    out = pl.pallas_call(
        _ce_kernel,
        out_shape=jax.ShapeDtypeStruct((1, 1), jnp.float32),
        in_specs=[
            pl.BlockSpec(memory_space=pltpu.MemorySpace.VMEM),
            pl.BlockSpec(memory_space=pltpu.MemorySpace.VMEM),
            pl.BlockSpec(memory_space=pltpu.MemorySpace.SMEM),
            pl.BlockSpec(memory_space=pltpu.MemorySpace.SMEM),
        ],
        out_specs=pl.BlockSpec(memory_space=pltpu.MemorySpace.SMEM),
    )(logits, onehot,
      jnp.asarray([temperature], jnp.float32),
      jnp.asarray([m], jnp.int32))
    return out[0, 0]


def _triplet_kernel(a_ref, p_ref, n_ref, out_ref):
    # a/p: (P, D) VMEM, n: (NN, P, D) VMEM, out: (1,1) SMEM
    a = a_ref[...]
    pos = p_ref[...]
    neg = n_ref[...]

    a_nrm = jnp.sqrt(jnp.sum(a * a, axis=-1, keepdims=True))          # (P, 1)
    p_nrm = jnp.sqrt(jnp.sum(pos * pos, axis=-1, keepdims=True))      # (P, 1)
    n_nrm = jnp.sqrt(jnp.sum(neg * neg, axis=-1, keepdims=True))      # (NN, P, 1)

    cos_ap = jnp.sum(a * pos, axis=-1, keepdims=True) / jnp.maximum(a_nrm * p_nrm, EPS_COS)
    cos_an = (jnp.sum(a[None, :, :] * neg, axis=-1, keepdims=True)
              / jnp.maximum(a_nrm[None, :, :] * n_nrm, EPS_COS))

    loss = jnp.maximum((1.0 - cos_ap)[None, :, :] - (1.0 - cos_an) + MARGIN, 0.0)  # (NN, P, 1)
    out_ref[0, 0] = jnp.sum(loss) * (1.0 / (loss.shape[0] * loss.shape[1]))


def triplet_loss(anchors, positives, negatives):
    # anchors/positives: (P, d); negatives: (num_neg, P, d) slot-major
    P, d = anchors.shape
    D = pl.cdiv(d, 128) * 128          # zero-pad d: exact for cosine distance
    if D != d:
        anchors = jnp.pad(anchors, ((0, 0), (0, D - d)))
        positives = jnp.pad(positives, ((0, 0), (0, D - d)))
        negatives = jnp.pad(negatives, ((0, 0), (0, 0), (0, D - d)))
    out = pl.pallas_call(
        _triplet_kernel,
        out_shape=jax.ShapeDtypeStruct((1, 1), jnp.float32),
        in_specs=[pl.BlockSpec(memory_space=pltpu.MemorySpace.VMEM)] * 3,
        out_specs=pl.BlockSpec(memory_space=pltpu.MemorySpace.SMEM),
    )(anchors, positives, negatives)
    return out[0, 0]


# ------------------------------- Glue logic -------------------------------

def set_alignment_graph_loss(input_embeddings, phrase_embeddings, graph_probs,
                             positives, svos, temperature, rng_seed=0):
    N, k, d = input_embeddings.shape
    m = phrase_embeddings.shape[0]

    # --- similarity matrix (Pallas, (m, N, k) layout) ---
    sim_mnk = similarity_matrix(phrase_embeddings, input_embeddings)

    # --- dense part of graph focal loss: independent of the matching, launch it now so it
    #     overlaps the host round-trip below ---
    focal_base = focal_base_sum(graph_probs)

    # --- Matcher.get_indices ---
    # TODO(synk): the original Matcher.get_indices (Hungarian-style matching) was not
    # provided; use greedy per-phrase argmax matching over the cosine-similarity matrix.
    sim_np = np.asarray(jax.device_get(sim_mnk))          # (m, N, k)
    batch_idxs, phrase_emb_idxs, input_emb_idxs = [], [], []
    for b, pos in enumerate(positives):
        taken = set()
        for p_idx in pos:
            order = np.argsort(-sim_np[p_idx, b])
            choice = next(int(i) for i in order if int(i) not in taken)
            taken.add(choice)
            batch_idxs.append(b)
            phrase_emb_idxs.append(int(p_idx))
            input_emb_idxs.append(choice)
    P = len(batch_idxs)

    b_arr = jnp.asarray(batch_idxs, jnp.int32)
    p_arr = jnp.asarray(phrase_emb_idxs, jnp.int32)
    i_arr = jnp.asarray(input_emb_idxs, jnp.int32)

    # --- hard negatives: top-k over the matched similarity rows, on device ---
    rows = sim_mnk[p_arr, b_arr]                          # (P, k)
    rows = rows.at[jnp.arange(P), i_arr].set(-jnp.inf)    # mask the matched positive slot
    _, hard_idx = lax.top_k(rows, NUM_HARD_NEG)           # (P, NUM_HARD_NEG)

    # --- random negatives ---
    # TODO(synk): numpy rng is a deterministic stand-in for torch.randperm; it mirrors the
    # original quirk that randperm(k-1) never draws slot k-1.
    rng = np.random.default_rng(rng_seed)
    rand_np = np.empty((P, NUM_RAND_NEG), np.int64)
    for j, i in enumerate(input_emb_idxs):
        perm = rng.permutation(k - 1)
        perm = perm[perm != i][:NUM_RAND_NEG]
        rand_np[j] = perm
    rand_idx = jnp.asarray(rand_np, jnp.int32)

    neg_idx = jnp.concatenate([hard_idx.T, rand_idx.T], axis=0)    # (num_neg, P) slot-major
    neg_embs = input_embeddings[b_arr[None, :], neg_idx]           # (num_neg, P, d)

    anchors = phrase_embeddings[p_arr]                             # (P, d) -- no num_neg tiling
    pos_embs = input_embeddings[b_arr, i_arr]                      # (P, d)
    triplet = triplet_loss(anchors, pos_embs, neg_embs)

    # --- cross entropy (Pallas) ---
    ce_logits = jnp.transpose(sim_mnk[:, b_arr, i_arr])            # (P, m)
    onehot = jax.nn.one_hot(p_arr, m, dtype=jnp.float32)
    ce = ce_loss(ce_logits, onehot, temperature)

    # --- graph focal loss: sparse correction for the few target==1 cells ---
    emb_idx_mapping = {}
    for b, p, i in zip(batch_idxs, phrase_emb_idxs, input_emb_idxs):
        emb_idx_mapping.setdefault(p, {})[b] = i
    pos_cells = set()
    for bi, svos_i in enumerate(svos):
        for s, v, o in svos_i:
            pos_cells.add((bi, emb_idx_mapping[s][bi],
                           emb_idx_mapping[o][bi], emb_idx_mapping[v][bi]))
    n_pos = len(pos_cells)
    if n_pos:
        cells = np.asarray(sorted(pos_cells), np.int32)
        x_pos = graph_probs[cells[:, 0], cells[:, 1], cells[:, 2], cells[:, 3]]
        p_pos = jax.nn.sigmoid(x_pos)
        loss1 = ALPHA * jax.nn.softplus(-x_pos) * (1.0 - p_pos) ** GAMMA
        loss0 = (1.0 - ALPHA) * jax.nn.softplus(x_pos) * p_pos ** GAMMA
        correction = jnp.sum(loss1 - loss0)
    else:
        correction = jnp.float32(0.0)
    # original divides by graph_target.sum(); guard only the degenerate no-SVO case
    graph = (focal_base + correction) / jnp.float32(max(n_pos, 1))

    return dict(triplet=triplet, ce=ce, graph=graph)


# ---------------------------------- main ----------------------------------

if __name__ == "__main__":
    key = jax.random.PRNGKey(0)
    N, k, d, m = 2, 8, 32, 6
    k1, k2, k3 = jax.random.split(key, 3)
    input_embeddings = jax.random.normal(k1, (N, k, d), jnp.float32)
    phrase_embeddings = jax.random.normal(k2, (m, d), jnp.float32)
    graph_probs = jax.random.normal(k3, (N, k, k, k), jnp.float32)
    positives = [[0, 1, 2], [3, 4, 5]]
    svos = [[(0, 1, 2), (2, 1, 0)], [(3, 4, 5)]]
    temperature = 10.0

    losses = set_alignment_graph_loss(input_embeddings, phrase_embeddings, graph_probs,
                                      positives, svos, temperature)
    losses = jax.tree_util.tree_map(jax.block_until_ready, losses)
    print("KERNEL_OK")
</pallas_src>

<mosaic_0001>
module attributes {stable_mosaic.version = 11 : i64} {
  func.func @_sim_kernel(%arg0: i32, %arg1: memref<6x32xf32, #tpu.memory_space<vmem>>, %arg2: memref<128x32xf32, #tpu.memory_space<vmem>>, %arg3: memref<6x128xf32, #tpu.memory_space<vmem>>) attributes {dimension_semantics = [#tpu.dimension_semantics<parallel>], iteration_bounds = array<i64: 1>, scalar_prefetch = 0 : i64, scratch_operands = 0 : i64, tpu.core_type = #tpu.core_type<tc>, window_params = [{pipeline_mode = #tpu.pipeline_mode<synchronous>, transform_indices = @transform_0, window_bounds = array<i64: 6, 32>}, {transform_indices = @transform_1, window_bounds = array<i64: 128, 32>}, {transform_indices = @transform_2, window_bounds = array<i64: 6, 128>}]} {
    %c0 = arith.constant 0 : index
    %c0_0 = arith.constant 0 : index
    %0 = vector.load %arg1[%c0, %c0_0] : memref<6x32xf32, #tpu.memory_space<vmem>>, vector<6x32xf32>
    %c0_1 = arith.constant 0 : index
    %c0_2 = arith.constant 0 : index
    %1 = vector.load %arg2[%c0_1, %c0_2] : memref<128x32xf32, #tpu.memory_space<vmem>>, vector<128x32xf32>
    %2 = arith.mulf %1, %1 : vector<128x32xf32>
    %cst = arith.constant dense<0.000000e+00> : vector<128xf32>
    %3 = vector.multi_reduction <add>, %2, %cst [1] : vector<128x32xf32> to vector<128xf32>
    %4 = vector.shape_cast %3 : vector<128xf32> to vector<128x1xf32>
    %cst_3 = arith.constant 1.000000e-24 : f32
    %5 = vector.broadcast %cst_3 : f32 to vector<128x1xf32>
    %6 = arith.maximumf %4, %5 : vector<128x1xf32>
    %7 = math.rsqrt %6 : vector<128x1xf32>
    %8 = vector.broadcast %7 : vector<128x1xf32> to vector<128x32xf32>
    %9 = arith.mulf %1, %8 : vector<128x32xf32>
    %cst_4 = arith.constant dense<0.000000e+00> : vector<6x128xf32>
    %10 = tpu.matmul %0, %9, %cst_4 {dimension_numbers = #tpu.dot_dimension_numbers<[1], [1], [0], [0], [0, 0, 1, 0], [], []>} : vector<6x32xf32>, vector<128x32xf32>, vector<6x128xf32> -> vector<6x128xf32>
    %c0_5 = arith.constant 0 : index
    %c0_6 = arith.constant 0 : index
    %11 = vector.load %arg3[%c0_5, %c0_6] : memref<6x128xf32, #tpu.memory_space<vmem>>, vector<6x128xf32>
    tpu.vector_store %arg3[%c0_5, %c0_6], %10 {strides = array<i32>} : memref<6x128xf32, #tpu.memory_space<vmem>>, vector<6x128xf32>,
    return
  }
  func.func @transform_0(%arg0: i32) -> (i32, i32) {
    %c0_i32 = arith.constant 0 : i32
    %c0_i32_0 = arith.constant 0 : i32
    %c0_i32_1 = arith.constant 0 : i32
    return %c0_i32, %c0_i32_0 : i32, i32
  }
  func.func @transform_1(%arg0: i32) -> (i32, i32) {
    %c0_i32 = arith.constant 0 : i32
    %c0_i32_0 = arith.constant 0 : i32
    return %arg0, %c0_i32 : i32, i32
  }
  func.func @transform_2(%arg0: i32) -> (i32, i32) {
    %c0_i32 = arith.constant 0 : i32
    %c0_i32_0 = arith.constant 0 : i32
    return %c0_i32, %arg0 : i32, i32
  }
}

</mosaic_0001>

<llo_original>
// kernel: tpu_custom_call.1
$region0: #{tpu_custom_call.1}
  #allocation0 [shape = 'u32[]', space=smem, size = 0x4, offset = 0x4, fixed_abs, tag = 'smem constant byte address 0x4 - core index']
  #allocation1 [shape = 'u32[144,128]{1,0:T(1,128)}', space=vmem, size = 0x12000, scoped, tag = 'internal scratch']
  %s0 = inlined_call_operand.vmem [shape: f32[6,32], index: 0, kind: input, shape index: {}]
  %s1 = inlined_call_operand.vmem [shape: f32[128,32], index: 1, kind: input, shape index: {}]
  %s2 = inlined_call_operand.hbm [shape: f32[6,128], index: 2, kind: output, shape index: {}]
  %s3 = sld [smem:[#allocation0]]
  $region18: #{tpu_custom_call.1} parent=0
    _
  %s5 = ssub.s32 1, %s3
  %s6 = scalar_select 0, %s5, %s3
  $region1: #{tpu_custom_call.1} parent=0
    #allocation2 [shape = 'u8[4096]{0}', space=vmem, size = 0x1000, scoped, tag = 'output window, operand 0, single buffered']
    #allocation3 [shape = 's32[1]{0}', space=sflag, size = 0x4, scoped, tag = 'scoped memory for tpu_custom_call.1']
    %7 = vsyncpa [#allocation3], 0
    // Predicated region
    $region2: #{tpu_custom_call.1} parent=1 // pred_check
      _
    $region3: #{tpu_custom_call.1} parent=1 // pred_check_branch
      %9 = sbr.rel (0) target = $region5
    $region4: #{tpu_custom_call.1} parent=1 // pred_region
      _
    $region5: #{tpu_custom_call.1} parent=1 // pred_fallthru
      _
    // Predicated region
    $region6: #{tpu_custom_call.1} parent=1 // pred_check
      _
    $region7: #{tpu_custom_call.1} parent=1 // pred_check_branch
      %11 = sbr.rel (0) target = $region9
    $region8: #{tpu_custom_call.1} parent=1 // pred_region
      _
    $region9: #{tpu_custom_call.1} parent=1 // pred_fallthru
      _
    %v12 = vld [vmem:[%s0] sm:$0x3f]
    %v13 = vld [vmem:[%s1] sm:$0xff]
    %v14 = vld [vmem:[%s1 + $0x8] sm:$0xff]
    %v15 = vld [vmem:[%s1 + $0x10] sm:$0xff]
    %v16 = vld [vmem:[%s1 + $0x18] sm:$0xff]
    %v17 = vld [vmem:[%s1 + $0x20] sm:$0xff]
    %v18 = vld [vmem:[%s1 + $0x28] sm:$0xff]
    %v19 = vld [vmem:[%s1 + $0x30] sm:$0xff]
    %v20 = vld [vmem:[%s1 + $0x38] sm:$0xff]
    %v21 = vld [vmem:[%s1 + $0x40] sm:$0xff]
    %v22 = vld [vmem:[%s1 + $0x48] sm:$0xff]
    %v23 = vld [vmem:[%s1 + $0x50] sm:$0xff]
    %v24 = vld [vmem:[%s1 + $0x58] sm:$0xff]
    %v25 = vld [vmem:[%s1 + $0x60] sm:$0xff]
    %v26 = vld [vmem:[%s1 + $0x68] sm:$0xff]
    %v27 = vld [vmem:[%s1 + $0x70] sm:$0xff]
    %v28 = vld [vmem:[%s1 + $0x78] sm:$0xff]
    %v29 = vmul.f32 %v13, %v13
    %v30 = vmul.f32 %v14, %v14
    %v31 = vmul.f32 %v15, %v15
    %v32 = vmul.f32 %v16, %v16
    %v33 = vmul.f32 %v17, %v17
    %v34 = vmul.f32 %v18, %v18
    %v35 = vmul.f32 %v19, %v19
    %v36 = vmul.f32 %v20, %v20
    %v37 = vmul.f32 %v21, %v21
    %v38 = vmul.f32 %v22, %v22
    %v39 = vmul.f32 %v23, %v23
    %v40 = vmul.f32 %v24, %v24
    %v41 = vmul.f32 %v25, %v25
    %v42 = vmul.f32 %v26, %v26
    %v43 = vmul.f32 %v27, %v27
    %v44 = vmul.f32 %v28, %v28
    %vm45 = vcmask 261120
    %v46 = vsel %vm45, %v29, 0.0
    %47 = vadd.xlane.f32.xlu0 %v46
    %v48 = vpop.xlane.xlu0 %47
    %v49 = vsel %vm45, %v30, 0.0
    %50 = vadd.xlane.f32.xlu0 %v49
    %v51 = vpop.xlane.xlu0 %50
    %v52 = vsel %vm45, %v31, 0.0
    %53 = vadd.xlane.f32.xlu0 %v52
    %v54 = vpop.xlane.xlu0 %53
    %v55 = vsel %vm45, %v32, 0.0
    %56 = vadd.xlane.f32.xlu0 %v55
    %v57 = vpop.xlane.xlu0 %56
    %v58 = vsel %vm45, %v33, 0.0
    %59 = vadd.xlane.f32.xlu0 %v58
    %v60 = vpop.xlane.xlu0 %59
    %v61 = vsel %vm45, %v34, 0.0
    %62 = vadd.xlane.f32.xlu0 %v61
    %v63 = vpop.xlane.xlu0 %62
    %v64 = vsel %vm45, %v35, 0.0
    %65 = vadd.xlane.f32.xlu0 %v64
    %v66 = vpop.xlane.xlu0 %65
    %v67 = vsel %vm45, %v36, 0.0
    %68 = vadd.xlane.f32.xlu0 %v67
    %v69 = vpop.xlane.xlu0 %68
    %v70 = vsel %vm45, %v37, 0.0
    %71 = vadd.xlane.f32.xlu0 %v70
    %v72 = vpop.xlane.xlu0 %71
    %v73 = vsel %vm45, %v38, 0.0
    %74 = vadd.xlane.f32.xlu0 %v73
    %v75 = vpop.xlane.xlu0 %74
    %v76 = vsel %vm45, %v39, 0.0
    %77 = vadd.xlane.f32.xlu0 %v76
    %v78 = vpop.xlane.xlu0 %77
    %v79 = vsel %vm45, %v40, 0.0
    %80 = vadd.xlane.f32.xlu0 %v79
    %v81 = vpop.xlane.xlu0 %80
    %v82 = vsel %vm45, %v41, 0.0
    %83 = vadd.xlane.f32.xlu0 %v82
    %v84 = vpop.xlane.xlu0 %83
    %v85 = vsel %vm45, %v42, 0.0
    %86 = vadd.xlane.f32.xlu0 %v85
    %v87 = vpop.xlane.xlu0 %86
    %v88 = vsel %vm45, %v43, 0.0
    %89 = vadd.xlane.f32.xlu0 %v88
    %v90 = vpop.xlane.xlu0 %89
    %v91 = vsel %vm45, %v44, 0.0
    %92 = vadd.xlane.f32.xlu0 %v91
    %v93 = vpop.xlane.xlu0 %92
    %v94 = vmax.f32 %v48, 1e-24
    %v95 = vmax.f32 %v51, 1e-24
    %v96 = vmax.f32 %v54, 1e-24
    %v97 = vmax.f32 %v57, 1e-24
    %v98 = vmax.f32 %v60, 1e-24
    %v99 = vmax.f32 %v63, 1e-24
    %v100 = vmax.f32 %v66, 1e-24
    %v101 = vmax.f32 %v69, 1e-24
    %v102 = vmax.f32 %v72, 1e-24
    %v103 = vmax.f32 %v75, 1e-24
    %v104 = vmax.f32 %v78, 1e-24
    %v105 = vmax.f32 %v81, 1e-24
    %v106 = vmax.f32 %v84, 1e-24
    %v107 = vmax.f32 %v87, 1e-24
    %v108 = vmax.f32 %v90, 1e-24
    %v109 = vmax.f32 %v93, 1e-24
    %v110 = vrsqrt.pop %v94
    %v111 = vrsqrt.pop %v95
    %v112 = vrsqrt.pop %v96
    %v113 = vrsqrt.pop %v97
    %v114 = vrsqrt.pop %v98
    %v115 = vrsqrt.pop %v99
    %v116 = vrsqrt.pop %v100
    %v117 = vrsqrt.pop %v101
    %v118 = vrsqrt.pop %v102
    %v119 = vrsqrt.pop %v103
    %v120 = vrsqrt.pop %v104
    %v121 = vrsqrt.pop %v105
    %v122 = vrsqrt.pop %v106
    %v123 = vrsqrt.pop %v107
    %v124 = vrsqrt.pop %v108
    %v125 = vrsqrt.pop %v109
    %v126 = vmul.f32 %v13, %v110
    %v127 = vmul.f32 %v14, %v111
    %v128 = vmul.f32 %v15, %v112
    %v129 = vmul.f32 %v16, %v113
    %v130 = vmul.f32 %v17, %v114
    %v131 = vmul.f32 %v18, %v115
    %v132 = vmul.f32 %v19, %v116
    %v133 = vmul.f32 %v20, %v117
    %v134 = vmul.f32 %v21, %v118
    %v135 = vmul.f32 %v22, %v119
    %v136 = vmul.f32 %v23, %v120
    %v137 = vmul.f32 %v24, %v121
    %v138 = vmul.f32 %v25, %v122
    %v139 = vmul.f32 %v26, %v123
    %v140 = vmul.f32 %v27, %v124
    %v141 = vmul.f32 %v28, %v125
    %v143 = vsel %vm45, %v12, 0
    %v146 = vsel %vm45, %v126, 0
    %v149 = vsel %vm45, %v127, 0
    %v152 = vsel %vm45, %v128, 0
    %v155 = vsel %vm45, %v129, 0
    %v158 = vsel %vm45, %v130, 0
    %v161 = vsel %vm45, %v131, 0
    %v164 = vsel %vm45, %v132, 0
    %v167 = vsel %vm45, %v133, 0
    %v170 = vsel %vm45, %v134, 0
    %v173 = vsel %vm45, %v135, 0
    %v176 = vsel %vm45, %v136, 0
    %v179 = vsel %vm45, %v137, 0
    %v182 = vsel %vm45, %v138, 0
    %v185 = vsel %vm45, %v139, 0
    %v188 = vsel %vm45, %v140, 0
    %v191 = vsel %vm45, %v141, 0
    %193 = vmatprep.subr.mxu0 0.0
    %194 = vmatpush1.xpose.msra.mxu0 %v146
    %195 = vmatprep.subr.mxu0 0.0
    %196 = vmatpush1.xpose.msra.mxu0 %v149
    %197 = vmatprep.subr.mxu0 0.0
    %198 = vmatpush1.xpose.msra.mxu0 %v152
    %199 = vmatprep.subr.mxu0 0.0
    %200 = vmatpush1.xpose.msra.mxu0 %v155
    %201 = vmatprep.subr.mxu0 0.0
    %202 = vmatpush1.xpose.msra.mxu0 %v158
    %203 = vmatprep.subr.mxu0 0.0
    %204 = vmatpush1.xpose.msra.mxu0 %v161
    %205 = vmatprep.subr.mxu0 0.0
    %206 = vmatpush1.xpose.msra.mxu0 %v164
    %207 = vmatprep.subr.mxu0 0.0
    %208 = vmatpush1.xpose.msra.mxu0 %v167
    %209 = vmatprep.subr.mxu0 0.0
    %210 = vmatpush1.xpose.msra.mxu0 %v170
    %211 = vmatprep.subr.mxu0 0.0
    %212 = vmatpush1.xpose.msra.mxu0 %v173
    %213 = vmatprep.subr.mxu0 0.0
    %214 = vmatpush1.xpose.msra.mxu0 %v176
    %215 = vmatprep.subr.mxu0 0.0
    %216 = vmatpush1.xpose.msra.mxu0 %v179
    %217 = vmatprep.subr.mxu0 0.0
    %218 = vmatpush1.xpose.msra.mxu0 %v182
    %219 = vmatprep.subr.mxu0 0.0
    %220 = vmatpush1.xpose.msra.mxu0 %v185
    %221 = vmatprep.subr.mxu0 0.0
    %222 = vmatpush1.xpose.msra.mxu0 %v188
    %223 = vmatprep.subr.mxu0 0.0
    %224 = vmatpush1.xpose.msra.mxu0 %v191
    %225 = vmatprep.subr.mxu0 0.0
    %226 = vmatpush1.xpose.msra.mxu0 0.0
    %227 = vmatprep.subr.mxu0 0.0
    %228 = vmatpush1.xpose.msra.mxu0 0.0
    %229 = vmatprep.subr.mxu0 0.0
    %230 = vmatpush1.xpose.msra.mxu0 0.0
    %231 = vmatprep.subr.mxu0 0.0
    %232 = vmatpush1.xpose.msra.mxu0 0.0
    %233 = vmatprep.subr.mxu0 0.0
    %234 = vmatpush1.xpose.msra.mxu0 0.0
    %235 = vmatprep.subr.mxu0 0.0
    %236 = vmatpush1.xpose.msra.mxu0 0.0
    %237 = vmatprep.subr.mxu0 0.0
    %238 = vmatpush1.xpose.msra.mxu0 0.0
    %239 = vmatprep.subr.mxu0 0.0
    %240 = vmatpush1.xpose.msra.mxu0 0.0
    %241 = vmatprep.subr.mxu0 0.0
    %242 = vmatpush1.xpose.msra.mxu0 0.0
    %243 = vmatprep.subr.mxu0 0.0
    %244 = vmatpush1.xpose.msra.mxu0 0.0
    %245 = vmatprep.subr.mxu0 0.0
    %246 = vmatpush1.xpose.msra.mxu0 0.0
    %247 = vmatprep.subr.mxu0 0.0
    %248 = vmatpush1.xpose.msra.mxu0 0.0
    %249 = vmatprep.subr.mxu0 0.0
    %250 = vmatpush1.xpose.msra.mxu0 0.0
    %251 = vmatprep.subr.mxu0 0.0
    %252 = vmatpush1.xpose.msra.mxu0 0.0
    %253 = vmatprep.subr.mxu0 0.0
    %254 = vmatpush1.xpose.msra.mxu0 0.0
    %255 = vmatprep.subr.mxu0 0.0
    %256 = vmatpush1.xpose.msra.mxu0 0.0
    %257 = vmatprep.mubr.f32.mxu0 0.0
    %258 = vmatmul.mubr.f32.gmra.mrb[0].mxu0 %v143
    %v259 = vpop.f32.mrb[0].mxu0
    %v260 = vadd.f32 0.0, %v259
    %v261 = vpop.f32.mrb[0].mxu0
    %262 = vdwg.mxu0
    %263 = vst [vmem:[#allocation2] sm:$0x3f] %v260
    // Predicated region
    $region10: #{tpu_custom_call.1} parent=1 // pred_check
      _
    $region11: #{tpu_custom_call.1} parent=1 // pred_check_branch
      %265 = sbr.rel (0) target = $region13
    $region12: #{tpu_custom_call.1} parent=1 // pred_region
      %s267 = ssub.s32 128, 128
      %268 = vsyncadd [#allocation3], %s267
      %s270 = sshll.u32 [#allocation2], 4
      %s271 = int_to_ptr.vmem [resolvable:$true] %s270
      %273 = dma.vmem_to_hbm [thread:$0]  %s271, 128, %s2, [#allocation3]
    $region13: #{tpu_custom_call.1} parent=1 // pred_fallthru
      _
    // Predicated region
    $region14: #{tpu_custom_call.1} parent=1 // pred_check
      _
    $region15: #{tpu_custom_call.1} parent=1 // pred_check_branch
      %275 = sbr.rel (0) target = $region17
    $region16: #{tpu_custom_call.1} parent=1 // pred_region
      %276 = dma.done [#allocation3], 128
    $region17: #{tpu_custom_call.1} parent=1 // pred_fallthru
      _
    %277 = vsyncpa [#allocation3], 1

</llo_original>
